<compile_context>
chip_gen: v7x
topology: tpu7x:2x2x1
jax: 0.10.0
libtpu: 0.0.40
codegen_flags: <defaults>
</compile_context>

<pallas_src>
import math

import jax
import jax.numpy as jnp
from jax.experimental import pallas as pl
from jax.experimental.pallas import tpu as pltpu

_LANES = 128
_MAX_DMA_CHUNKS = 8  # a few DMAs in flight is plenty; HBM BW is the limiter


def _chunk_rows(rows: int, max_chunks: int = _MAX_DMA_CHUNKS):
    """Split `rows` into <= max_chunks contiguous (start, size) chunks.

    Every chunk except possibly the last is a multiple of 8 rows so each DMA
    moves whole (8, 128) tiles.  All values are static Python ints.
    """
    n_chunks = min(max_chunks, max(1, rows // 8))
    if n_chunks <= 1:
        return [(0, rows)]
    base = (rows // n_chunks) // 8 * 8  # >= 8 by construction of n_chunks
    chunks = []
    for i in range(n_chunks - 1):
        chunks.append((i * base, base))
    last_start = (n_chunks - 1) * base
    chunks.append((last_start, rows - last_start))
    return chunks


def _make_hbm_copy_kernel(chunks):
    """Kernel that copies x -> o via direct HBM->HBM DMAs (no VMEM staging)."""

    def kernel(x_ref, o_ref, sems):
        copies = []
        for i, (start, size) in enumerate(chunks):
            cp = pltpu.make_async_copy(
                x_ref.at[pl.ds(start, size), :],
                o_ref.at[pl.ds(start, size), :],
                sems.at[i],
            )
            cp.start()
            copies.append(cp)
        # All DMAs are in flight; now wait for completion.
        for cp in copies:
            cp.wait()

    return kernel


def reshape_256_to_16x16(x: jax.Array, *, materialize: bool = False) -> jax.Array:
    """Equivalent of torch `x.view(-1, 1, 16, 16)`.

    materialize=False (default): pure metadata reshape, zero cost.
    materialize=True: returns a freshly copied buffer, produced by a Pallas
    kernel that does chunked HBM->HBM DMAs.
    """
    total = math.prod(x.shape)
    assert total % 256 == 0, "total element count must be a multiple of 256"
    n = total // 256
    out_shape = (n, 1, 16, 16)

    if not materialize:
        # Zero-copy path: the reshape is metadata-only.
        return jnp.reshape(x, out_shape)

    rows = total // _LANES  # total % 128 == 0 since total % 256 == 0
    # Free metadata op: present a lane-dense, contiguous 2D slab to the kernel.
    x2d = jnp.reshape(x, (rows, _LANES))

    chunks = _chunk_rows(rows)

    y2d = pl.pallas_call(
        _make_hbm_copy_kernel(chunks),
        out_shape=jax.ShapeDtypeStruct((rows, _LANES), x.dtype),
        in_specs=[pl.BlockSpec(memory_space=pl.ANY)],
        out_specs=pl.BlockSpec(memory_space=pl.ANY),
        scratch_shapes=[pltpu.SemaphoreType.DMA((len(chunks),))],
    )(x2d)

    # Free metadata op: final view to (-1, 1, 16, 16), matching torch.view.
    return jnp.reshape(y2d, out_shape)


if __name__ == "__main__":
    key = jax.random.PRNGKey(0)
    # NCHW input (2, 4, 16, 16) -> 2048 elements -> output (8, 1, 16, 16).
    x = jax.random.normal(key, (2, 4, 16, 16), dtype=jnp.float32)

    # Reference: torch's x.view(-1, 1, 16, 16) == row-major reshape.
    ref = jnp.reshape(x, (-1, 1, 16, 16))

    # Default (recommended) zero-copy path.
    out_view = reshape_256_to_16x16(x)
    out_view = jax.block_until_ready(out_view)
    assert out_view.shape == (8, 1, 16, 16), out_view.shape
    assert out_view.dtype == x.dtype
    assert jnp.array_equal(out_view, ref), "mismatch vs. reference (view path)"

    # Materialized path: runs the Pallas HBM->HBM DMA copy kernel once.
    out_copy = reshape_256_to_16x16(x, materialize=True)
    out_copy = jax.block_until_ready(out_copy)
    assert out_copy.shape == (8, 1, 16, 16), out_copy.shape
    assert out_copy.dtype == x.dtype
    assert jnp.array_equal(out_copy, ref), "mismatch vs. reference (copy path)"

    print("KERNEL_OK")
</pallas_src>

<mosaic_0001>
module attributes {stable_mosaic.version = 11 : i64} {
  func.func @kernel(%arg0: memref<16x128xf32, #tpu.memory_space<any>>, %arg1: memref<16x128xf32, #tpu.memory_space<any>>, %arg2: memref<2x!tpu.dma_semaphore, #tpu.memory_space<semaphore_mem>>) attributes {dimension_semantics = [], scalar_prefetch = 0 : i64, scratch_operands = 1 : i64, tpu.core_type = #tpu.core_type<tc>} {
    %c0_i32 = arith.constant 0 : i32
    %c0_i32_0 = arith.constant 0 : i32
    %c0_i32_1 = arith.constant 0 : i32
    %0 = tpu.memref_slice %arg0[%c0_i32_0, %c0_i32_1] : memref<16x128xf32, #tpu.memory_space<any>> -> memref<8x128xf32, #tpu.memory_space<any>>
    %c0_i32_2 = arith.constant 0 : i32
    %c0_i32_3 = arith.constant 0 : i32
    %1 = tpu.memref_slice %arg1[%c0_i32_2, %c0_i32_3] : memref<16x128xf32, #tpu.memory_space<any>> -> memref<8x128xf32, #tpu.memory_space<any>>
    %2 = tpu.memref_slice %arg2[%c0_i32] : memref<2x!tpu.dma_semaphore, #tpu.memory_space<semaphore_mem>> -> memref<1x!tpu.dma_semaphore, #tpu.memory_space<semaphore_mem>>
    %3 = tpu.memref_squeeze %2 : memref<1x!tpu.dma_semaphore, #tpu.memory_space<semaphore_mem>> -> memref<!tpu.dma_semaphore, #tpu.memory_space<semaphore_mem>>
    tpu.enqueue_dma source(%0 : memref<8x128xf32, #tpu.memory_space<any>>) target(%1 : memref<8x128xf32, #tpu.memory_space<any>>) target_semaphore(%3 : memref<!tpu.dma_semaphore, #tpu.memory_space<semaphore_mem>>)
    %c1_i32 = arith.constant 1 : i32
    %c8_i32 = arith.constant 8 : i32
    %c0_i32_4 = arith.constant 0 : i32
    %4 = tpu.memref_slice %arg0[%c8_i32, %c0_i32_4] : memref<16x128xf32, #tpu.memory_space<any>> -> memref<8x128xf32, #tpu.memory_space<any>>
    %c8_i32_5 = arith.constant 8 : i32
    %c0_i32_6 = arith.constant 0 : i32
    %5 = tpu.memref_slice %arg1[%c8_i32_5, %c0_i32_6] : memref<16x128xf32, #tpu.memory_space<any>> -> memref<8x128xf32, #tpu.memory_space<any>>
    %6 = tpu.memref_slice %arg2[%c1_i32] : memref<2x!tpu.dma_semaphore, #tpu.memory_space<semaphore_mem>> -> memref<1x!tpu.dma_semaphore, #tpu.memory_space<semaphore_mem>>
    %7 = tpu.memref_squeeze %6 : memref<1x!tpu.dma_semaphore, #tpu.memory_space<semaphore_mem>> -> memref<!tpu.dma_semaphore, #tpu.memory_space<semaphore_mem>>
    tpu.enqueue_dma source(%4 : memref<8x128xf32, #tpu.memory_space<any>>) target(%5 : memref<8x128xf32, #tpu.memory_space<any>>) target_semaphore(%7 : memref<!tpu.dma_semaphore, #tpu.memory_space<semaphore_mem>>)
    %c0_i32_7 = arith.constant 0 : i32
    %c0_i32_8 = arith.constant 0 : i32
    %c0_i32_9 = arith.constant 0 : i32
    %8 = tpu.memref_slice %arg0[%c0_i32_8, %c0_i32_9] : memref<16x128xf32, #tpu.memory_space<any>> -> memref<8x128xf32, #tpu.memory_space<any>>
    %c0_i32_10 = arith.constant 0 : i32
    %c0_i32_11 = arith.constant 0 : i32
    %9 = tpu.memref_slice %arg1[%c0_i32_10, %c0_i32_11] : memref<16x128xf32, #tpu.memory_space<any>> -> memref<8x128xf32, #tpu.memory_space<any>>
    %10 = tpu.memref_slice %arg2[%c0_i32_7] : memref<2x!tpu.dma_semaphore, #tpu.memory_space<semaphore_mem>> -> memref<1x!tpu.dma_semaphore, #tpu.memory_space<semaphore_mem>>
    %11 = tpu.memref_squeeze %10 : memref<1x!tpu.dma_semaphore, #tpu.memory_space<semaphore_mem>> -> memref<!tpu.dma_semaphore, #tpu.memory_space<semaphore_mem>>
    tpu.wait_dma2 semaphore(%11 : memref<!tpu.dma_semaphore, #tpu.memory_space<semaphore_mem>>) src(%8 : memref<8x128xf32, #tpu.memory_space<any>>) dst(%9 : memref<8x128xf32, #tpu.memory_space<any>>)
    %c1_i32_12 = arith.constant 1 : i32
    %c8_i32_13 = arith.constant 8 : i32
    %c0_i32_14 = arith.constant 0 : i32
    %12 = tpu.memref_slice %arg0[%c8_i32_13, %c0_i32_14] : memref<16x128xf32, #tpu.memory_space<any>> -> memref<8x128xf32, #tpu.memory_space<any>>
    %c8_i32_15 = arith.constant 8 : i32
    %c0_i32_16 = arith.constant 0 : i32
    %13 = tpu.memref_slice %arg1[%c8_i32_15, %c0_i32_16] : memref<16x128xf32, #tpu.memory_space<any>> -> memref<8x128xf32, #tpu.memory_space<any>>
    %14 = tpu.memref_slice %arg2[%c1_i32_12] : memref<2x!tpu.dma_semaphore, #tpu.memory_space<semaphore_mem>> -> memref<1x!tpu.dma_semaphore, #tpu.memory_space<semaphore_mem>>
    %15 = tpu.memref_squeeze %14 : memref<1x!tpu.dma_semaphore, #tpu.memory_space<semaphore_mem>> -> memref<!tpu.dma_semaphore, #tpu.memory_space<semaphore_mem>>
    tpu.wait_dma2 semaphore(%15 : memref<!tpu.dma_semaphore, #tpu.memory_space<semaphore_mem>>) src(%12 : memref<8x128xf32, #tpu.memory_space<any>>) dst(%13 : memref<8x128xf32, #tpu.memory_space<any>>)
    return
  }
}

</mosaic_0001>

<llo_original>
// kernel: tpu_custom_call.1
$region0: #{tpu_custom_call.1}
  #allocation0 [shape = 'u32[]', space=smem, size = 0x4, offset = 0x4, fixed_abs, tag = 'smem constant byte address 0x4 - core index']
  #allocation1 [shape = 'u32[144,128]{1,0:T(1,128)}', space=vmem, size = 0x12000, scoped, tag = 'internal scratch']
  #allocation2 [shape = 's32[2]{0}', space=sflag, size = 0x8, scoped, tag = 'scratch operand']
  #allocation3 [shape = 's32[]', space=sflag, size = 0x4, offset = 0, fixed_abs, tag = 'sflag constant byte address 0x0 - dummy sync flag']
  #allocation4 [shape = 'u32[0]{0}', space=smem, size = 0, offset = 0, fixed_abs, tag = 'smem constant byte address 0x0 - null']
  #allocation5 [shape = 's32[]', space=sflag, size = 0x4, offset = 0, fixed_abs, tag = 'sflag constant byte address 0x0 - dummy sync flag']
  #allocation6 [shape = 'u32[0]{0}', space=smem, size = 0, offset = 0, fixed_abs, tag = 'smem constant byte address 0x0 - null']
  %s0 = inlined_call_operand.hbm [shape: f32[16,128], index: 0, kind: input, shape index: {}]
  %s1 = inlined_call_operand.hbm [shape: f32[16,128], index: 1, kind: output, shape index: {}]
  %s2 = sld [smem:[#allocation0]]
  $region2: #{tpu_custom_call.1} parent=0
    _
  %s4 = ssub.s32 1, %s2
  %s5 = scalar_select 0, %s4, %s2
  %s7 = sshll.u32 1, 14
  %s8 = sxor.u32 4294967295, %s7
  %s11 = sshll.u32 3, 24
  %s12 = sxor.u32 4294967295, %s11
  %s13 = sand.u32 0, %s12
  %s15 = sor.u32 %s13, 0
  %18 = dma.general %s0, 128, %s1, [#allocation2], [#allocation3], [#allocation4], %s15, 0
  %s19 = scalar_lea.hbm %s0, 128
  %s20 = scalar_lea.hbm %s1, 128
  %s21 = scalar_lea.sflag [#allocation2], 1
  %s23 = sshll.u32 1, 14
  %s24 = sxor.u32 4294967295, %s23
  %s27 = sshll.u32 3, 24
  %s28 = sxor.u32 4294967295, %s27
  %s29 = sand.u32 0, %s28
  %s31 = sor.u32 %s29, 0
  %34 = dma.general %s19, 128, %s20, %s21, [#allocation5], [#allocation6], %s31, 0
  %s35 = smul.u32 8, 1
  %s36 = sshll.u32 %s35, 4
  %37 = dma.done [#allocation2], %s36
  %s38 = sshll.u32 %s35, 4
  %39 = dma.done %s21, %s38
  %40 = vsyncmov [#allocation2]
  %s41 = vpop.sfrf %40
  %p42 = scmp.eq.s32.totalorder %s41, 0
  %p43 = pneg %p42
  %45 = shalt.err (%p43)
  %s46 = scalar_lea.sflag [#allocation2], 1
  %47 = vsyncmov %s46
  %s48 = vpop.sfrf %47
  %p49 = scmp.eq.s32.totalorder %s48, 0
  %p50 = pneg %p49
  %52 = shalt.err (%p50)

</llo_original>
